<compile_context>
chip_gen: v7x
topology: tpu7x:2x2x1
jax: 0.10.0
libtpu: 0.0.40
codegen_flags: <defaults>
</compile_context>

<pallas_src>
import jax
import jax.numpy as jnp
import numpy as np
from jax.experimental import pallas as pl
from jax.experimental.pallas import tpu as pltpu

BN_EPS = 1e-5


def st_decouple_kernel(xs_ref, xt_ref, ws_ref, wt_ref, ss_ref, st_ref, out_ref):
    """One grid step handles a batch-block of `bb` elements.

    xs_ref : [C*T, bb*V] bf16  x[b,c,t,v] viewed with rows (c,t), cols (b,v)
    xt_ref : [C*V, bb*T] bf16  rows (c,v), cols (b,t)
    ws_ref : [Cb, C*T]   bf16  scale_s * W_s / T, repeated over t (reduction in MXU)
    wt_ref : [Cb, C*V]   bf16  scale_t * W_t / V, repeated over v
    ss_ref : [Cb, 1]     f32   folded BN shift, spatial branch
    st_ref : [Cb, 1]     f32   folded BN shift, temporal branch
    out_ref: [Cb, bb*(V+T)]    cols [0, bb*V) spatial, cols [bb*V, ..) temporal
    """
    n_sp = xs_ref.shape[1]                          # bb*V (static)
    # Two MXU matmuls; the T / V means are part of the contraction (weights expanded).
    ys = jnp.dot(ws_ref[...], xs_ref[...], preferred_element_type=jnp.float32)
    yt = jnp.dot(wt_ref[...], xt_ref[...], preferred_element_type=jnp.float32)
    out_ref[:, :n_sp] = jnp.maximum(ys + ss_ref[...], 0.0).astype(out_ref.dtype)
    out_ref[:, n_sp:] = jnp.maximum(yt + st_ref[...], 0.0).astype(out_ref.dtype)


def _fold_bn(conv_b, gamma, beta, mean, var, eps=BN_EPS):
    """BN(W@x + b) == scale * (W@x) + shift   (inference-mode BN)."""
    scale = gamma / jnp.sqrt(var + eps)
    shift = scale * (conv_b - mean) + beta
    return scale, shift


def _vmem_estimate(bb, C, T, V, Cb, data_isz, out_isz):
    """Per-grid-step VMEM estimate (double-buffered inputs/outputs + weights)."""
    xs = C * T * bb * V * data_isz
    xt = C * V * bb * T * data_isz
    out = Cb * bb * (T + V) * out_isz
    w = Cb * C * (T + V) * data_isz
    return 2 * (xs + xt + out) + 2 * w


def _pick_batch_block(B, C, T, V, Cb, data_isz, out_isz, vmem_budget):
    """Largest batch block that fits the VMEM budget; prefer a single grid step."""
    if _vmem_estimate(B, C, T, V, Cb, data_isz, out_isz) <= vmem_budget:
        return B                                    # one step: no per-step overhead
    for bb in (d for d in range(B, 0, -1) if B % d == 0):
        # Non-full blocks must keep the last dims 128-lane aligned ((8,128) rule).
        if (bb * V) % 128 == 0 and (bb * T) % 128 == 0 and \
                _vmem_estimate(bb, C, T, V, Cb, data_isz, out_isz) <= vmem_budget:
            return bb
    # TODO(synk): non-128-aligned batch splits would need padding / pl.Element blocking;
    # fall back to a single step and rely on the raised vmem_limit_bytes.
    return B


def st_decouple_net(feat, params, compute_dtype=jnp.bfloat16):
    """feat: [B, C, T, V] -> (spatial [B, Cb, 1, V], temporal [B, Cb, T, 1])."""
    B, C, T, V = feat.shape
    ws, wt = params["s_w"], params["t_w"]
    Cb = ws.shape[0]
    L = T + V

    # Fold BN (eval mode) into scale/shift; fold scale and the 1/T, 1/V mean
    # denominators into the conv weights, expanded over the reduced axis so the
    # reduction happens inside the MXU contraction.
    scale_s, shift_s = _fold_bn(params["s_b"], params["s_gamma"], params["s_beta"],
                                params["s_mean"], params["s_var"])
    scale_t, shift_t = _fold_bn(params["t_b"], params["t_gamma"], params["t_beta"],
                                params["t_mean"], params["t_var"])
    ws_exp = jnp.broadcast_to(((scale_s[:, None] * ws) / T)[:, :, None],
                              (Cb, C, T)).reshape(Cb, C * T).astype(compute_dtype)
    wt_exp = jnp.broadcast_to(((scale_t[:, None] * wt) / V)[:, :, None],
                              (Cb, C, V)).reshape(Cb, C * V).astype(compute_dtype)
    ss = shift_s.reshape(Cb, 1).astype(jnp.float32)
    st = shift_t.reshape(Cb, 1).astype(jnp.float32)

    # Lane-dense data views: rows = contraction axis, cols = (batch, kept axis).
    # allow_input_fusion (below) lets XLA fuse these transposes into the operands.
    xs = jnp.transpose(feat, (1, 2, 0, 3)).reshape(C * T, B * V).astype(compute_dtype)
    xt = jnp.transpose(feat, (1, 3, 0, 2)).reshape(C * V, B * T).astype(compute_dtype)

    # Per-chip VMEM budget (v5e 16 MiB scoped default, v7x 64 MiB physical, ...).
    try:
        vmem_cap = int(pltpu.get_tpu_info().vmem_capacity_bytes)
    except Exception:  # pragma: no cover - conservative fallback
        vmem_cap = 64 << 20
    data_isz = jnp.dtype(compute_dtype).itemsize
    out_isz = jnp.dtype(feat.dtype).itemsize
    bb = _pick_batch_block(B, C, T, V, Cb, data_isz, out_isz, vmem_cap // 2)
    nb = B // bb
    est = _vmem_estimate(bb, C, T, V, Cb, data_isz, out_isz)
    vmem_limit = int(min(vmem_cap, max(2 * est, 16 << 20)))

    out = pl.pallas_call(
        st_decouple_kernel,
        out_shape=jax.ShapeDtypeStruct((Cb, B * L), feat.dtype),
        grid=(nb,),
        in_specs=[
            pl.BlockSpec((C * T, bb * V), lambda i: (0, i)),   # spatial data view
            pl.BlockSpec((C * V, bb * T), lambda i: (0, i)),   # temporal data view
            pl.BlockSpec((Cb, C * T), lambda i: (0, 0)),       # expanded spatial weights
            pl.BlockSpec((Cb, C * V), lambda i: (0, 0)),       # expanded temporal weights
            pl.BlockSpec((Cb, 1), lambda i: (0, 0)),           # spatial BN shift
            pl.BlockSpec((Cb, 1), lambda i: (0, 0)),           # temporal BN shift
        ],
        out_specs=pl.BlockSpec((Cb, bb * L), lambda i: (0, i)),
        compiler_params=pltpu.CompilerParams(
            dimension_semantics=("parallel",),
            vmem_limit_bytes=vmem_limit,
            allow_input_fusion=[True] * 6,
        ),
    )(xs, xt, ws_exp, wt_exp, ss, st)

    # Unpack the lane-dense slab back to the PyTorch output shapes (layout only).
    out_r = out.reshape(Cb, nb, bb * L)
    sp = out_r[:, :, :bb * V].reshape(Cb, nb, bb, V)
    sp = jnp.transpose(sp, (1, 2, 0, 3)).reshape(B, Cb, 1, V)
    tp = out_r[:, :, bb * V:].reshape(Cb, nb, bb, T)
    tp = jnp.transpose(tp, (1, 2, 0, 3)).reshape(B, Cb, T, 1)
    return sp, tp


def ref_forward(feat, params):
    """NumPy float64 reference mirroring the PyTorch forward (BN in eval mode)."""
    f = np.asarray(feat, dtype=np.float64)

    def branch(x2d, w, b, gamma, beta, mean, var):
        w, b = np.asarray(w, np.float64), np.asarray(b, np.float64)
        gamma, beta = np.asarray(gamma, np.float64), np.asarray(beta, np.float64)
        mean, var = np.asarray(mean, np.float64), np.asarray(var, np.float64)
        y = np.einsum('oc,bcl->bol', w, x2d) + b[None, :, None]
        y = gamma[None, :, None] * (y - mean[None, :, None]) \
            / np.sqrt(var + BN_EPS)[None, :, None] + beta[None, :, None]
        return np.maximum(y, 0.0)

    sp = branch(f.mean(axis=2), params["s_w"], params["s_b"], params["s_gamma"],
                params["s_beta"], params["s_mean"], params["s_var"])   # [B, Cb, V]
    tp = branch(f.mean(axis=3), params["t_w"], params["t_b"], params["t_gamma"],
                params["t_beta"], params["t_mean"], params["t_var"])   # [B, Cb, T]
    B, Cb, V = sp.shape
    T = tp.shape[-1]
    return sp.reshape(B, Cb, 1, V), tp.reshape(B, Cb, T, 1)


def init_params(key, n_channel, n_branch_channel):
    """Deterministic synthetic parameters (freshly-initialized module, BN eval stats)."""
    ks = jax.random.split(key, 6)
    C, Cb = n_channel, n_branch_channel
    bound = 1.0 / np.sqrt(C)   # kaiming-uniform-ish fan_in bound for a 1x1 conv
    return {
        "s_w": jax.random.uniform(ks[0], (Cb, C), jnp.float32, -bound, bound),
        "s_b": jax.random.uniform(ks[1], (Cb,), jnp.float32, -bound, bound),
        "s_gamma": jnp.ones((Cb,), jnp.float32),
        "s_beta": jnp.zeros((Cb,), jnp.float32),
        "s_mean": jax.random.normal(ks[2], (Cb,), jnp.float32) * 0.1,
        "s_var": jnp.ones((Cb,), jnp.float32) * 1.2,
        "t_w": jax.random.uniform(ks[3], (Cb, C), jnp.float32, -bound, bound),
        "t_b": jax.random.uniform(ks[4], (Cb,), jnp.float32, -bound, bound),
        "t_gamma": jnp.ones((Cb,), jnp.float32),
        "t_beta": jnp.zeros((Cb,), jnp.float32),
        "t_mean": jax.random.normal(ks[5], (Cb,), jnp.float32) * 0.1,
        "t_var": jnp.ones((Cb,), jnp.float32) * 0.8,
    }


if __name__ == "__main__":
    # Small config: n_channel=8, n_frame=16, n_joint=16, n_person=2, N(batch)=2
    N, M, C, T, V = 2, 2, 8, 16, 16
    Cb = C // 2   # n_branch_channel default

    key = jax.random.PRNGKey(0)
    k_x, k_p = jax.random.split(key)
    feat = jax.random.normal(k_x, (N * M, C, T, V), dtype=jnp.float32)
    params = init_params(k_p, C, Cb)

    sp, tp = st_decouple_net(feat, params)           # bf16 MXU path, f32 accumulation
    sp, tp = jax.block_until_ready(sp), jax.block_until_ready(tp)

    sp_ref, tp_ref = ref_forward(feat, params)
    assert sp.shape == (N * M, Cb, 1, V) and tp.shape == (N * M, Cb, T, 1)
    # bf16 inputs/weights with f32 accumulation vs float64 reference: ~1e-3 typical.
    np.testing.assert_allclose(np.asarray(sp), sp_ref, rtol=3e-2, atol=3e-2)
    np.testing.assert_allclose(np.asarray(tp), tp_ref, rtol=3e-2, atol=3e-2)

    # TODO(synk): at realistic ST-GCN scale, split the two branches into two separate
    # lane-dense outputs once bb*V and bb*T each reach 128 (halves output writeback).
    print("KERNEL_OK")
</pallas_src>

<mosaic_0001>
module attributes {stable_mosaic.version = 11 : i64} {
  func.func @st_decouple_kernel(%arg0: i32, %arg1: memref<128x64xbf16, #tpu.memory_space<vmem>>, %arg2: memref<128x64xbf16, #tpu.memory_space<vmem>>, %arg3: memref<4x128xbf16, #tpu.memory_space<vmem>>, %arg4: memref<4x128xbf16, #tpu.memory_space<vmem>>, %arg5: memref<4x1xf32, #tpu.memory_space<vmem>>, %arg6: memref<4x1xf32, #tpu.memory_space<vmem>>, %arg7: memref<4x128xf32, #tpu.memory_space<vmem>>) attributes {dimension_semantics = [#tpu.dimension_semantics<parallel>], iteration_bounds = array<i64: 1>, scalar_prefetch = 0 : i64, scratch_operands = 0 : i64, tpu.core_type = #tpu.core_type<tc>, window_params = [{transform_indices = @transform_0, window_bounds = array<i64: 128, 64>}, {transform_indices = @transform_1, window_bounds = array<i64: 128, 64>}, {pipeline_mode = #tpu.pipeline_mode<synchronous>, transform_indices = @transform_2, window_bounds = array<i64: 4, 128>}, {pipeline_mode = #tpu.pipeline_mode<synchronous>, transform_indices = @transform_3, window_bounds = array<i64: 4, 128>}, {pipeline_mode = #tpu.pipeline_mode<synchronous>, transform_indices = @transform_4, window_bounds = array<i64: 4, 1>}, {pipeline_mode = #tpu.pipeline_mode<synchronous>, transform_indices = @transform_5, window_bounds = array<i64: 4, 1>}, {transform_indices = @transform_6, window_bounds = array<i64: 4, 128>}]} {
    %c0 = arith.constant 0 : index
    %c0_0 = arith.constant 0 : index
    %0 = vector.load %arg3[%c0, %c0_0] : memref<4x128xbf16, #tpu.memory_space<vmem>>, vector<4x128xbf16>
    %c0_1 = arith.constant 0 : index
    %c0_2 = arith.constant 0 : index
    %1 = vector.load %arg1[%c0_1, %c0_2] : memref<128x64xbf16, #tpu.memory_space<vmem>>, vector<128x64xbf16>
    %cst = arith.constant dense<0.000000e+00> : vector<4x64xf32>
    %2 = tpu.matmul %0, %1, %cst {dimension_numbers = #tpu.dot_dimension_numbers<[1], [0], [0], [1], [0, 0, 1, 1], [], []>} : vector<4x128xbf16>, vector<128x64xbf16>, vector<4x64xf32> -> vector<4x64xf32>
    %c0_3 = arith.constant 0 : index
    %c0_4 = arith.constant 0 : index
    %3 = vector.load %arg4[%c0_3, %c0_4] : memref<4x128xbf16, #tpu.memory_space<vmem>>, vector<4x128xbf16>
    %c0_5 = arith.constant 0 : index
    %c0_6 = arith.constant 0 : index
    %4 = vector.load %arg2[%c0_5, %c0_6] : memref<128x64xbf16, #tpu.memory_space<vmem>>, vector<128x64xbf16>
    %cst_7 = arith.constant dense<0.000000e+00> : vector<4x64xf32>
    %5 = tpu.matmul %3, %4, %cst_7 {dimension_numbers = #tpu.dot_dimension_numbers<[1], [0], [0], [1], [0, 0, 1, 1], [], []>} : vector<4x128xbf16>, vector<128x64xbf16>, vector<4x64xf32> -> vector<4x64xf32>
    %c0_8 = arith.constant 0 : index
    %c0_9 = arith.constant 0 : index
    %6 = vector.load %arg5[%c0_8, %c0_9] : memref<4x1xf32, #tpu.memory_space<vmem>>, vector<4x1xf32>
    %7 = vector.broadcast %6 : vector<4x1xf32> to vector<4x64xf32>
    %8 = arith.addf %2, %7 : vector<4x64xf32>
    %cst_10 = arith.constant 0.000000e+00 : f32
    %9 = vector.broadcast %cst_10 : f32 to vector<4x64xf32>
    %10 = arith.maximumf %8, %9 : vector<4x64xf32>
    %c0_11 = arith.constant 0 : index
    %c0_12 = arith.constant 0 : index
    %11 = vector.load %arg7[%c0_11, %c0_12] : memref<4x128xf32, #tpu.memory_space<vmem>>, vector<4x64xf32>
    tpu.vector_store %arg7[%c0_11, %c0_12], %10 {strides = array<i32>} : memref<4x128xf32, #tpu.memory_space<vmem>>, vector<4x64xf32>,
    %c0_13 = arith.constant 0 : index
    %c0_14 = arith.constant 0 : index
    %12 = vector.load %arg6[%c0_13, %c0_14] : memref<4x1xf32, #tpu.memory_space<vmem>>, vector<4x1xf32>
    %13 = vector.broadcast %12 : vector<4x1xf32> to vector<4x64xf32>
    %14 = arith.addf %5, %13 : vector<4x64xf32>
    %cst_15 = arith.constant 0.000000e+00 : f32
    %15 = vector.broadcast %cst_15 : f32 to vector<4x64xf32>
    %16 = arith.maximumf %14, %15 : vector<4x64xf32>
    %c0_16 = arith.constant 0 : index
    %c64 = arith.constant 64 : index
    %17 = vector.load %arg7[%c0_16, %c64] : memref<4x128xf32, #tpu.memory_space<vmem>>, vector<4x64xf32>
    tpu.vector_store %arg7[%c0_16, %c64], %16 {strides = array<i32>} : memref<4x128xf32, #tpu.memory_space<vmem>>, vector<4x64xf32>,
    return
  }
  func.func @transform_0(%arg0: i32) -> (i32, i32) {
    %c0_i32 = arith.constant 0 : i32
    %c0_i32_0 = arith.constant 0 : i32
    return %c0_i32, %arg0 : i32, i32
  }
  func.func @transform_1(%arg0: i32) -> (i32, i32) {
    %c0_i32 = arith.constant 0 : i32
    %c0_i32_0 = arith.constant 0 : i32
    return %c0_i32, %arg0 : i32, i32
  }
  func.func @transform_2(%arg0: i32) -> (i32, i32) {
    %c0_i32 = arith.constant 0 : i32
    %c0_i32_0 = arith.constant 0 : i32
    %c0_i32_1 = arith.constant 0 : i32
    return %c0_i32, %c0_i32_0 : i32, i32
  }
  func.func @transform_3(%arg0: i32) -> (i32, i32) {
    %c0_i32 = arith.constant 0 : i32
    %c0_i32_0 = arith.constant 0 : i32
    %c0_i32_1 = arith.constant 0 : i32
    return %c0_i32, %c0_i32_0 : i32, i32
  }
  func.func @transform_4(%arg0: i32) -> (i32, i32) {
    %c0_i32 = arith.constant 0 : i32
    %c0_i32_0 = arith.constant 0 : i32
    %c0_i32_1 = arith.constant 0 : i32
    return %c0_i32, %c0_i32_0 : i32, i32
  }
  func.func @transform_5(%arg0: i32) -> (i32, i32) {
    %c0_i32 = arith.constant 0 : i32
    %c0_i32_0 = arith.constant 0 : i32
    %c0_i32_1 = arith.constant 0 : i32
    return %c0_i32, %c0_i32_0 : i32, i32
  }
  func.func @transform_6(%arg0: i32) -> (i32, i32) {
    %c0_i32 = arith.constant 0 : i32
    %c0_i32_0 = arith.constant 0 : i32
    return %c0_i32, %arg0 : i32, i32
  }
}

</mosaic_0001>

<llo_original>
// kernel: tpu_custom_call.1
$region0: #{tpu_custom_call.1}
  #allocation0 [shape = 'u32[]', space=smem, size = 0x4, offset = 0x4, fixed_abs, tag = 'smem constant byte address 0x4 - core index']
  #allocation1 [shape = 'u32[144,128]{1,0:T(1,128)}', space=vmem, size = 0x12000, scoped, tag = 'internal scratch']
  %s0 = inlined_call_operand.vmem [shape: bf16[128,64], index: 0, kind: input, shape index: {}]
  %s1 = inlined_call_operand.vmem [shape: bf16[128,64], index: 1, kind: input, shape index: {}]
  %s2 = inlined_call_operand.vmem [shape: bf16[4,128], index: 2, kind: input, shape index: {}]
  %s3 = inlined_call_operand.vmem [shape: bf16[4,128], index: 3, kind: input, shape index: {}]
  %s4 = inlined_call_operand.vmem [shape: f32[4,1], index: 4, kind: input, shape index: {}]
  %s5 = inlined_call_operand.vmem [shape: f32[4,1], index: 5, kind: input, shape index: {}]
  %s6 = inlined_call_operand.hbm [shape: f32[4,128], index: 6, kind: output, shape index: {}]
  %s7 = sld [smem:[#allocation0]]
  $region34: #{tpu_custom_call.1} parent=0
    _
  %s9 = ssub.s32 1, %s7
  %s10 = scalar_select 0, %s9, %s7
  $region1: #{tpu_custom_call.1} parent=0
    #allocation2 [shape = 'u8[2048]{0}', space=vmem, size = 0x800, scoped, tag = 'output window, operand 0, single buffered']
    #allocation3 [shape = 's32[1]{0}', space=sflag, size = 0x4, scoped, tag = 'scoped memory for tpu_custom_call.1']
    %11 = vsyncpa [#allocation3], 0
    // Predicated region
    $region2: #{tpu_custom_call.1} parent=1 // pred_check
      _
    $region3: #{tpu_custom_call.1} parent=1 // pred_check_branch
      %13 = sbr.rel (0) target = $region5
    $region4: #{tpu_custom_call.1} parent=1 // pred_region
      _
    $region5: #{tpu_custom_call.1} parent=1 // pred_fallthru
      _
    // Predicated region
    $region6: #{tpu_custom_call.1} parent=1 // pred_check
      _
    $region7: #{tpu_custom_call.1} parent=1 // pred_check_branch
      %15 = sbr.rel (0) target = $region9
    $region8: #{tpu_custom_call.1} parent=1 // pred_region
      _
    $region9: #{tpu_custom_call.1} parent=1 // pred_fallthru
      _
    // Predicated region
    $region10: #{tpu_custom_call.1} parent=1 // pred_check
      _
    $region11: #{tpu_custom_call.1} parent=1 // pred_check_branch
      %17 = sbr.rel (0) target = $region13
    $region12: #{tpu_custom_call.1} parent=1 // pred_region
      _
    $region13: #{tpu_custom_call.1} parent=1 // pred_fallthru
      _
    // Predicated region
    $region14: #{tpu_custom_call.1} parent=1 // pred_check
      _
    $region15: #{tpu_custom_call.1} parent=1 // pred_check_branch
      %19 = sbr.rel (0) target = $region17
    $region16: #{tpu_custom_call.1} parent=1 // pred_region
      _
    $region17: #{tpu_custom_call.1} parent=1 // pred_fallthru
      _
    // Predicated region
    $region18: #{tpu_custom_call.1} parent=1 // pred_check
      _
    $region19: #{tpu_custom_call.1} parent=1 // pred_check_branch
      %21 = sbr.rel (0) target = $region21
    $region20: #{tpu_custom_call.1} parent=1 // pred_region
      _
    $region21: #{tpu_custom_call.1} parent=1 // pred_fallthru
      _
    // Predicated region
    $region22: #{tpu_custom_call.1} parent=1 // pred_check
      _
    $region23: #{tpu_custom_call.1} parent=1 // pred_check_branch
      %23 = sbr.rel (0) target = $region25
    $region24: #{tpu_custom_call.1} parent=1 // pred_region
      _
    $region25: #{tpu_custom_call.1} parent=1 // pred_fallthru
      _
    %v25 = vld [vmem:[%s2] sm:$0x3]
    %v26 = vld [vmem:[%s0] sm:$0xf]
    %v27 = vld [vmem:[%s0 + $0x4] sm:$0xf]
    %v28 = vld [vmem:[%s0 + $0x8] sm:$0xf]
    %v29 = vld [vmem:[%s0 + $0xc] sm:$0xf]
    %v30 = vld [vmem:[%s0 + $0x10] sm:$0xf]
    %v31 = vld [vmem:[%s0 + $0x14] sm:$0xf]
    %v32 = vld [vmem:[%s0 + $0x18] sm:$0xf]
    %v33 = vld [vmem:[%s0 + $0x1c] sm:$0xf]
    %v34 = vld [vmem:[%s0 + $0x20] sm:$0xf]
    %v35 = vld [vmem:[%s0 + $0x24] sm:$0xf]
    %v36 = vld [vmem:[%s0 + $0x28] sm:$0xf]
    %v37 = vld [vmem:[%s0 + $0x2c] sm:$0xf]
    %v38 = vld [vmem:[%s0 + $0x30] sm:$0xf]
    %v39 = vld [vmem:[%s0 + $0x34] sm:$0xf]
    %v40 = vld [vmem:[%s0 + $0x38] sm:$0xf]
    %v41 = vld [vmem:[%s0 + $0x3c] sm:$0xf]
    %v42 = vld [vmem:[%s3] sm:$0x3]
    %v43 = vld [vmem:[%s1] sm:$0xf]
    %v44 = vld [vmem:[%s1 + $0x4] sm:$0xf]
    %v45 = vld [vmem:[%s1 + $0x8] sm:$0xf]
    %v46 = vld [vmem:[%s1 + $0xc] sm:$0xf]
    %v47 = vld [vmem:[%s1 + $0x10] sm:$0xf]
    %v48 = vld [vmem:[%s1 + $0x14] sm:$0xf]
    %v49 = vld [vmem:[%s1 + $0x18] sm:$0xf]
    %v50 = vld [vmem:[%s1 + $0x1c] sm:$0xf]
    %v51 = vld [vmem:[%s1 + $0x20] sm:$0xf]
    %v52 = vld [vmem:[%s1 + $0x24] sm:$0xf]
    %v53 = vld [vmem:[%s1 + $0x28] sm:$0xf]
    %v54 = vld [vmem:[%s1 + $0x2c] sm:$0xf]
    %v55 = vld [vmem:[%s1 + $0x30] sm:$0xf]
    %v56 = vld [vmem:[%s1 + $0x34] sm:$0xf]
    %v57 = vld [vmem:[%s1 + $0x38] sm:$0xf]
    %v58 = vld [vmem:[%s1 + $0x3c] sm:$0xf]
    %v59 = vld [vmem:[%s4] sm:$0xf]
    %61 = vset.pattern.permute.xlu0 0
    %62 = vperm.xlu0 %61, %v59
    %v63 = vpop.permute.xlu0 %62
    %v81 = vunpack.c.l.b16 %v26
    %v82 = vunpack.c.l.b16 %v27
    %v83 = vunpack.c.l.b16 %v28
    %v84 = vunpack.c.l.b16 %v29
    %v85 = vunpack.c.l.b16 %v30
    %v86 = vunpack.c.l.b16 %v31
    %v87 = vunpack.c.l.b16 %v32
    %v88 = vunpack.c.l.b16 %v33
    %v89 = vunpack.c.l.b16 %v34
    %v90 = vunpack.c.l.b16 %v35
    %v91 = vunpack.c.l.b16 %v36
    %v92 = vunpack.c.l.b16 %v37
    %v93 = vunpack.c.l.b16 %v38
    %v94 = vunpack.c.l.b16 %v39
    %v95 = vunpack.c.l.b16 %v40
    %v96 = vunpack.c.l.b16 %v41
    %v97 = vpack.c.b16 %v82, %v81
    %v98 = vpack.c.b16 %v84, %v83
    %v99 = vpack.c.b16 %v86, %v85
    %v100 = vpack.c.b16 %v88, %v87
    %v101 = vpack.c.b16 %v90, %v89
    %v102 = vpack.c.b16 %v92, %v91
    %v103 = vpack.c.b16 %v94, %v93
    %v104 = vpack.c.b16 %v96, %v95
    %113 = vmatprep.subr.bf16.mxu0 0
    %114 = vmatpush1.bf16.msra.mxu0 %v97
    %115 = vmatprep.subr.bf16.mxu0 0
    %116 = vmatpush1.bf16.msra.mxu0 %v98
    %117 = vmatprep.subr.bf16.mxu0 0
    %118 = vmatpush1.bf16.msra.mxu0 %v99
    %119 = vmatprep.subr.bf16.mxu0 0
    %120 = vmatpush1.bf16.msra.mxu0 %v100
    %121 = vmatprep.subr.bf16.mxu0 0
    %122 = vmatpush1.bf16.msra.mxu0 %v101
    %123 = vmatprep.subr.bf16.mxu0 0
    %124 = vmatpush1.bf16.msra.mxu0 %v102
    %125 = vmatprep.subr.bf16.mxu0 0
    %126 = vmatpush1.bf16.msra.mxu0 %v103
    %127 = vmatprep.subr.bf16.mxu0 0
    %128 = vmatpush1.bf16.msra.mxu0 %v104
    %129 = vmatprep.subr.bf16.mxu0 0
    %130 = vmatpush1.bf16.msra.mxu0 0
    %131 = vmatprep.subr.bf16.mxu0 0
    %132 = vmatpush1.bf16.msra.mxu0 0
    %133 = vmatprep.subr.bf16.mxu0 0
    %134 = vmatpush1.bf16.msra.mxu0 0
    %135 = vmatprep.subr.bf16.mxu0 0
    %136 = vmatpush1.bf16.msra.mxu0 0
    %137 = vmatprep.subr.bf16.mxu0 0
    %138 = vmatpush1.bf16.msra.mxu0 0
    %139 = vmatprep.subr.bf16.mxu0 0
    %140 = vmatpush1.bf16.msra.mxu0 0
    %141 = vmatprep.subr.bf16.mxu0 0
    %142 = vmatpush1.bf16.msra.mxu0 0
    %143 = vmatprep.subr.bf16.mxu0 0
    %144 = vmatpush1.bf16.msra.mxu0 0
    %145 = vmatprep.mubr.bf16.mxu0 0
    %146 = vmatmul.mubr.bf16.gmra.mrb[0].mxu0 %v25
    %v147 = vpop.f32.mrb[0].mxu0
    %v148 = vadd.f32 %v63, %v147
    %v149 = vpop.f32.mrb[0].mxu0
    %v150 = vpop.f32.mrb[0].mxu0
    %v151 = vpop.f32.mrb[0].mxu0
    %152 = vdwg.mxu0
    %v153 = vmax.f32 %v148, 0.0
    %vm154 = vcmask 519168
    %155 = vst.msk [vmem:[#allocation2] sm:$0xf] %vm154, %v153
    %v156 = vld [vmem:[%s5] sm:$0xf]
    %158 = vset.pattern.permute.xlu0 0
    %159 = vperm.xlu0 %158, %v156
    %v160 = vpop.permute.xlu0 %159
    %v178 = vunpack.c.l.b16 %v43
    %v179 = vunpack.c.l.b16 %v44
    %v180 = vunpack.c.l.b16 %v45
    %v181 = vunpack.c.l.b16 %v46
    %v182 = vunpack.c.l.b16 %v47
    %v183 = vunpack.c.l.b16 %v48
    %v184 = vunpack.c.l.b16 %v49
    %v185 = vunpack.c.l.b16 %v50
    %v186 = vunpack.c.l.b16 %v51
    %v187 = vunpack.c.l.b16 %v52
    %v188 = vunpack.c.l.b16 %v53
    %v189 = vunpack.c.l.b16 %v54
    %v190 = vunpack.c.l.b16 %v55
    %v191 = vunpack.c.l.b16 %v56
    %v192 = vunpack.c.l.b16 %v57
    %v193 = vunpack.c.l.b16 %v58
    %v194 = vpack.c.b16 %v179, %v178
    %v195 = vpack.c.b16 %v181, %v180
    %v196 = vpack.c.b16 %v183, %v182
    %v197 = vpack.c.b16 %v185, %v184
    %v198 = vpack.c.b16 %v187, %v186
    %v199 = vpack.c.b16 %v189, %v188
    %v200 = vpack.c.b16 %v191, %v190
    %v201 = vpack.c.b16 %v193, %v192
    %210 = vmatprep.subr.bf16.mxu0 0
    %211 = vmatpush1.bf16.msra.mxu0 %v194
    %212 = vmatprep.subr.bf16.mxu0 0
    %213 = vmatpush1.bf16.msra.mxu0 %v195
    %214 = vmatprep.subr.bf16.mxu0 0
    %215 = vmatpush1.bf16.msra.mxu0 %v196
    %216 = vmatprep.subr.bf16.mxu0 0
    %217 = vmatpush1.bf16.msra.mxu0 %v197
    %218 = vmatprep.subr.bf16.mxu0 0
    %219 = vmatpush1.bf16.msra.mxu0 %v198
    %220 = vmatprep.subr.bf16.mxu0 0
    %221 = vmatpush1.bf16.msra.mxu0 %v199
    %222 = vmatprep.subr.bf16.mxu0 0
    %223 = vmatpush1.bf16.msra.mxu0 %v200
    %224 = vmatprep.subr.bf16.mxu0 0
    %225 = vmatpush1.bf16.msra.mxu0 %v201
    %226 = vmatprep.subr.bf16.mxu0 0
    %227 = vmatpush1.bf16.msra.mxu0 0
    %228 = vmatprep.subr.bf16.mxu0 0
    %229 = vmatpush1.bf16.msra.mxu0 0
    %230 = vmatprep.subr.bf16.mxu0 0
    %231 = vmatpush1.bf16.msra.mxu0 0
    %232 = vmatprep.subr.bf16.mxu0 0
    %233 = vmatpush1.bf16.msra.mxu0 0
    %234 = vmatprep.subr.bf16.mxu0 0
    %235 = vmatpush1.bf16.msra.mxu0 0
    %236 = vmatprep.subr.bf16.mxu0 0
    %237 = vmatpush1.bf16.msra.mxu0 0
    %238 = vmatprep.subr.bf16.mxu0 0
    %239 = vmatpush1.bf16.msra.mxu0 0
    %240 = vmatprep.subr.bf16.mxu0 0
    %241 = vmatpush1.bf16.msra.mxu0 0
    %242 = vmatprep.mubr.bf16.mxu0 0
    %243 = vmatmul.mubr.bf16.gmra.mrb[0].mxu0 %v42
    %v244 = vpop.f32.mrb[0].mxu0
    %v245 = vadd.f32 %v160, %v244
    %v246 = vpop.f32.mrb[0].mxu0
    %v247 = vpop.f32.mrb[0].mxu0
    %v248 = vpop.f32.mrb[0].mxu0
    %249 = vdwg.mxu0
    %v250 = vmax.f32 %v245, 0.0
    %252 = vrot.lane.b32.xlu0 %v250, 64
    %v253 = vpop.permute.xlu0 %252
    %vm255 = vcmask 1043968
    %256 = vst.msk [vmem:[#allocation2] sm:$0xf] %vm255, %v253
    // Predicated region
    $region26: #{tpu_custom_call.1} parent=1 // pred_check
      _
    $region27: #{tpu_custom_call.1} parent=1 // pred_check_branch
      %258 = sbr.rel (0) target = $region29
    $region28: #{tpu_custom_call.1} parent=1 // pred_region
      %s260 = ssub.s32 64, 64
      %261 = vsyncadd [#allocation3], %s260
      %s263 = sshll.u32 [#allocation2], 4
      %s264 = int_to_ptr.vmem [resolvable:$true] %s263
      %266 = dma.vmem_to_hbm [thread:$0]  %s264, 64, %s6, [#allocation3]
    $region29: #{tpu_custom_call.1} parent=1 // pred_fallthru
      _
    // Predicated region
    $region30: #{tpu_custom_call.1} parent=1 // pred_check
      _
    $region31: #{tpu_custom_call.1} parent=1 // pred_check_branch
      %268 = sbr.rel (0) target = $region33
    $region32: #{tpu_custom_call.1} parent=1 // pred_region
      %269 = dma.done [#allocation3], 64
    $region33: #{tpu_custom_call.1} parent=1 // pred_fallthru
      _
    %270 = vsyncpa [#allocation3], 1

</llo_original>
